<compile_context>
chip_gen: v5e
topology: v5e:2x2
jax: 0.10.0
libtpu: 0.0.40
codegen_flags: <defaults>
</compile_context>

<pallas_src>
import jax
import jax.numpy as jnp
from jax.experimental import pallas as pl
from jax.experimental.pallas import tpu as pltpu

LN_EPS = 1e-6  # dee.transformer.LayerNorm default eps


# ----------------------------------------------------------------------------
# small static helpers (trace-time Python)
# ----------------------------------------------------------------------------
def _largest_divisor_leq(n: int, cap: int) -> int:
    for d in range(min(cap, n), 0, -1):
        if n % d == 0:
            return d
    return 1


def _unroll_factor(n: int) -> int:
    for u in (8, 4, 2):
        if n % u == 0:
            return u
    return 1


def _vmem_limit_bytes(est_bytes: int):
    # Leave the default scoped limit alone for small problems; only raise it
    # when the estimate approaches the v5e 16-MiB scoped default.  Cap at the
    # v7x physical VMEM (64 MiB).
    if est_bytes <= 12 * 1024 * 1024:
        return None
    return int(min(est_bytes * 2, 64 * 1024 * 1024))


# ----------------------------------------------------------------------------
# fused positional add + LayerNorm epilogue (shared by both kernels)
# ----------------------------------------------------------------------------
def _add_pos_layernorm(x_tok, pos, gamma, beta, hidden):
    """[rows, H] f32: (tok + pos) -> annotated-transformer LayerNorm."""
    x = x_tok + pos
    # One pass: the two reductions are independent -> can dual-issue on XLUs.
    s1 = jnp.sum(x, axis=-1, keepdims=True)
    s2 = jnp.sum(x * x, axis=-1, keepdims=True)
    mean = s1 * (1.0 / hidden)
    var = (s2 - s1 * mean) * (1.0 / (hidden - 1))          # unbiased variance
    std = jnp.sqrt(jnp.maximum(var, 0.0))
    inv = pl.reciprocal(std + LN_EPS, approx=True)         # EUP, off the VPU
    # TODO(synk): train-mode Dropout(p=0.1) not implemented; eval -> identity.
    return gamma * ((x - mean) * inv) + beta


# ----------------------------------------------------------------------------
# Path A: token table resident in VMEM (small vocab) -- no gather DMAs at all
# ----------------------------------------------------------------------------
def _make_vmem_table_kernel(vocab, seq, hidden, unroll):
    def kernel(ids_ref,       # SMEM scalar prefetch: [B, S] int32
               tok_tab_ref,   # VMEM (resident): [V, H] f32
               pos_ref,       # VMEM (resident): [S, H] f32
               gamma_ref,     # VMEM: [1, H]
               beta_ref,      # VMEM: [1, H]
               out_ref,       # VMEM out block: [1, S, H]
               tok_buf):      # VMEM scratch: [S, H]
        b = pl.program_id(0)

        # Gather the S token rows with plain VMEM loads (spare vld slots).
        @pl.loop(0, seq // unroll)
        def _(i):
            r0 = pl.multiple_of(i * unroll, unroll)
            for u in range(unroll):                       # unrolled row copies
                s = r0 + u
                tok_id = jnp.minimum(jnp.maximum(ids_ref[b, s], 0), vocab - 1)
                tok_buf[pl.ds(s, 1), :] = tok_tab_ref[pl.ds(tok_id, 1), :]

        out_ref[0] = _add_pos_layernorm(
            tok_buf[...], pos_ref[...], gamma_ref[...], beta_ref[...], hidden)

    return kernel


# ----------------------------------------------------------------------------
# Path B: token table in HBM -- chunked, double-buffered manual DMA gather
# ----------------------------------------------------------------------------
def _make_dma_gather_kernel(vocab, seq, hidden, chunk, unroll):
    num_chunks = seq // chunk

    def kernel(ids_ref,       # SMEM scalar prefetch: [B, S] int32
               tok_tab_hbm,   # pl.ANY (HBM): [V, H] f32
               pos_ref,       # VMEM (resident): [S, H] f32
               gamma_ref,     # VMEM: [1, H]
               beta_ref,      # VMEM: [1, H]
               out_ref,       # VMEM out block: [1, S, H]
               tok_buf,       # VMEM scratch: [2, chunk, H]
               sem):          # DMA semaphores: (2,)
        b = pl.program_id(0)

        def issue_chunk(c, slot):
            base = c * chunk

            @pl.loop(0, chunk // unroll)
            def _(i):
                r0 = i * unroll
                for u in range(unroll):        # unrolled descriptor issue
                    s = r0 + u
                    tok_id = jnp.minimum(
                        jnp.maximum(ids_ref[b, base + s], 0), vocab - 1)
                    pltpu.make_async_copy(
                        tok_tab_hbm.at[pl.ds(tok_id, 1), :],
                        tok_buf.at[slot, pl.ds(s, 1), :],
                        sem.at[slot],
                    ).start()

        def wait_chunk(slot):
            # One aggregated wait: descriptor spans the whole chunk buffer
            # (chunk*H*4 bytes == the `chunk` row copies issued on this sem).
            pltpu.make_async_copy(
                tok_buf.at[slot], tok_buf.at[slot], sem.at[slot]).wait()

        issue_chunk(0, 0)                                   # prime slot 0

        @pl.loop(0, num_chunks)
        def _(c):
            slot = c & 1

            @pl.when(c + 1 < num_chunks)                    # prefetch next chunk
            def _():
                issue_chunk(c + 1, 1 - slot)

            wait_chunk(slot)
            base = pl.multiple_of(c * chunk, chunk)
            y = _add_pos_layernorm(
                tok_buf[slot], pos_ref[pl.ds(base, chunk), :],
                gamma_ref[...], beta_ref[...], hidden)
            out_ref[0, pl.ds(base, chunk), :] = y

    return kernel


# ----------------------------------------------------------------------------
# Wrapper
# ----------------------------------------------------------------------------
def ner_token_embedding_forward(params, batch_token_ids, *,
                                force_dma_path=False,
                                table_vmem_budget_bytes=8 * 1024 * 1024):
    tok_emb = params["tok_emb"]
    pos_emb = params["pos_emb"]
    gamma = params["gamma"]
    beta = params["beta"]

    V, H = tok_emb.shape
    B, S = batch_token_ids.shape
    assert S <= pos_emb.shape[0], "sentence longer than max_sent_len"

    ids = batch_token_ids.astype(jnp.int32)
    pos_rows = pos_emb[:S]                                  # [S, H] rows used

    # NOTE: for best perf H should be a multiple of 128 and S a multiple of 8
    # (lane-dense stores, full vregs); BERT-style H=768/1024 already is.  The
    # toy shapes are left unpadded (padding H would require masking the LN
    # reduction).

    use_vmem_table = (not force_dma_path) and (V * H * 4 <= table_vmem_budget_bytes)

    common_specs = [
        pl.BlockSpec((S, H), lambda b, ids_sm: (0, 0)),     # pos rows (resident)
        pl.BlockSpec((1, H), lambda b, ids_sm: (0, 0)),     # LN gamma
        pl.BlockSpec((1, H), lambda b, ids_sm: (0, 0)),     # LN beta
    ]
    out_spec = pl.BlockSpec((1, S, H), lambda b, ids_sm: (b, 0, 0))

    if use_vmem_table:
        unroll = _unroll_factor(S)
        kernel = _make_vmem_table_kernel(V, S, H, unroll)
        in_specs = [pl.BlockSpec((V, H), lambda b, ids_sm: (0, 0))] + common_specs
        scratch = [pltpu.VMEM((S, H), jnp.float32)]
        est_bytes = 4 * (2 * V * H + 5 * S * H + 4 * H)
    else:
        chunk = _largest_divisor_leq(S, 128)
        unroll = _unroll_factor(chunk)
        kernel = _make_dma_gather_kernel(V, S, H, chunk, unroll)
        in_specs = [pl.BlockSpec(memory_space=pl.ANY)] + common_specs
        scratch = [
            pltpu.VMEM((2, chunk, H), jnp.float32),
            pltpu.SemaphoreType.DMA((2,)),
        ]
        est_bytes = 4 * (2 * chunk * H + 5 * S * H + 4 * H)

    grid_spec = pltpu.PrefetchScalarGridSpec(
        num_scalar_prefetch=1,                              # token ids -> SMEM
        grid=(B,),                                          # B>=2 -> megacore split on v7x
        in_specs=in_specs,
        out_specs=out_spec,
        scratch_shapes=scratch,
    )

    return pl.pallas_call(
        kernel,
        out_shape=jax.ShapeDtypeStruct((B, S, H), jnp.float32),
        grid_spec=grid_spec,
        compiler_params=pltpu.CompilerParams(
            dimension_semantics=("parallel",),
            vmem_limit_bytes=_vmem_limit_bytes(est_bytes),
        ),
    )(ids, tok_emb, pos_rows, gamma, beta)


# ----------------------------------------------------------------------------
# Deterministic synthetic parameters (PyTorch-like init: N(0,1) embeddings,
# LayerNorm weight=1 / bias=0)
# ----------------------------------------------------------------------------
def init_params(key, vocab_size, hidden_size, max_sent_len=256):
    k_tok, k_pos = jax.random.split(key, 2)
    return {
        "tok_emb": jax.random.normal(k_tok, (vocab_size, hidden_size), jnp.float32),
        "pos_emb": jax.random.normal(k_pos, (max_sent_len, hidden_size), jnp.float32),
        "gamma": jnp.ones((1, hidden_size), jnp.float32),
        "beta": jnp.zeros((1, hidden_size), jnp.float32),
    }


def _reference_forward(params, token_ids):
    S = token_ids.shape[1]
    H = params["tok_emb"].shape[1]
    x = params["tok_emb"][token_ids] + params["pos_emb"][:S][None, :, :]
    mean = x.mean(-1, keepdims=True)
    xc = x - mean
    std = jnp.sqrt((xc * xc).sum(-1, keepdims=True) / (H - 1))
    return params["gamma"] * xc / (std + LN_EPS) + params["beta"]


if __name__ == "__main__":
    B, S, H, V, MAXLEN = 2, 8, 32, 64, 256
    key = jax.random.PRNGKey(0)
    k_params, k_ids = jax.random.split(key)

    params = init_params(k_params, V, H, MAXLEN)
    token_ids = jax.random.randint(k_ids, (B, S), 0, V, dtype=jnp.int32)

    ref = _reference_forward(params, token_ids)

    # Path A: small vocab -> VMEM-resident token table (no gather DMAs).
    out_vmem = jax.jit(
        lambda p, t: ner_token_embedding_forward(p, t))(params, token_ids)
    jax.block_until_ready(out_vmem)

    # Path B: HBM table with chunked double-buffered DMA gather (large vocab).
    out_dma = jax.jit(
        lambda p, t: ner_token_embedding_forward(p, t, force_dma_path=True)
    )(params, token_ids)
    jax.block_until_ready(out_dma)

    for out in (out_vmem, out_dma):
        assert out.shape == (B, S, H)
        assert bool(jnp.all(jnp.isfinite(out)))
        # approx reciprocal + one-pass variance -> allow ~1e-3-level rel error
        assert jnp.allclose(out, ref, atol=2e-2, rtol=2e-2), float(
            jnp.max(jnp.abs(out - ref)))

    print("KERNEL_OK")
</pallas_src>

<mosaic_0001>
module attributes {stable_mosaic.version = 11 : i64} {
  func.func @kernel(%arg0: i32, %arg1: memref<2x8xi32, #tpu.memory_space<smem>>, %arg2: memref<64x32xf32, #tpu.memory_space<vmem>>, %arg3: memref<8x32xf32, #tpu.memory_space<vmem>>, %arg4: memref<1x32xf32, #tpu.memory_space<vmem>>, %arg5: memref<1x32xf32, #tpu.memory_space<vmem>>, %arg6: memref<1x8x32xf32, #tpu.memory_space<vmem>>, %arg7: memref<8x32xf32, #tpu.memory_space<vmem>>) attributes {dimension_semantics = [#tpu.dimension_semantics<parallel>], iteration_bounds = array<i64: 2>, scalar_prefetch = 1 : i64, scratch_operands = 1 : i64, tpu.core_type = #tpu.core_type<tc>, window_params = [{pipeline_mode = #tpu.pipeline_mode<synchronous>, transform_indices = @transform_0, window_bounds = array<i64: 64, 32>}, {pipeline_mode = #tpu.pipeline_mode<synchronous>, transform_indices = @transform_1, window_bounds = array<i64: 8, 32>}, {pipeline_mode = #tpu.pipeline_mode<synchronous>, transform_indices = @transform_2, window_bounds = array<i64: 1, 32>}, {pipeline_mode = #tpu.pipeline_mode<synchronous>, transform_indices = @transform_3, window_bounds = array<i64: 1, 32>}, {transform_indices = @transform_4, window_bounds = array<i64: 1, 8, 32>}]} {
    %c0_i32 = arith.constant 0 : i32
    %c1_i32 = arith.constant 1 : i32
    %0 = arith.muli %c0_i32, %c1_i32 : i32
    %c0_i32_0 = arith.constant 0 : i32
    %1 = arith.addi %c0_i32_0, %0 : i32
    %c8_i32 = arith.constant 8 : i32
    %2 = arith.muli %1, %c8_i32 : i32
    %3 = tpu.assume_multiple %2, 8 : i32
    %c0_i32_1 = arith.constant 0 : i32
    %4 = arith.addi %3, %c0_i32_1 : i32
    %5 = arith.index_cast %arg0 : i32 to index
    %6 = arith.index_cast %4 : i32 to index
    %7 = memref.load %arg1[%5, %6] : memref<2x8xi32, #tpu.memory_space<smem>>
    %c0_i32_2 = arith.constant 0 : i32
    %8 = arith.maxsi %7, %c0_i32_2 : i32
    %c63_i32 = arith.constant 63 : i32
    %9 = arith.minsi %8, %c63_i32 : i32
    %10 = arith.index_cast %9 : i32 to index
    %c0 = arith.constant 0 : index
    %11 = vector.load %arg2[%10, %c0] : memref<64x32xf32, #tpu.memory_space<vmem>>, vector<1x32xf32>
    %12 = arith.index_cast %4 : i32 to index
    %c0_3 = arith.constant 0 : index
    %13 = vector.load %arg7[%12, %c0_3] : memref<8x32xf32, #tpu.memory_space<vmem>>, vector<1x32xf32>
    tpu.vector_store %arg7[%12, %c0_3], %11 {strides = array<i32>} : memref<8x32xf32, #tpu.memory_space<vmem>>, vector<1x32xf32>,
    %c1_i32_4 = arith.constant 1 : i32
    %14 = arith.addi %3, %c1_i32_4 : i32
    %15 = arith.index_cast %arg0 : i32 to index
    %16 = arith.index_cast %14 : i32 to index
    %17 = memref.load %arg1[%15, %16] : memref<2x8xi32, #tpu.memory_space<smem>>
    %c0_i32_5 = arith.constant 0 : i32
    %18 = arith.maxsi %17, %c0_i32_5 : i32
    %c63_i32_6 = arith.constant 63 : i32
    %19 = arith.minsi %18, %c63_i32_6 : i32
    %20 = arith.index_cast %19 : i32 to index
    %c0_7 = arith.constant 0 : index
    %21 = vector.load %arg2[%20, %c0_7] : memref<64x32xf32, #tpu.memory_space<vmem>>, vector<1x32xf32>
    %22 = arith.index_cast %14 : i32 to index
    %c0_8 = arith.constant 0 : index
    %23 = vector.load %arg7[%22, %c0_8] : memref<8x32xf32, #tpu.memory_space<vmem>>, vector<1x32xf32>
    tpu.vector_store %arg7[%22, %c0_8], %21 {strides = array<i32>} : memref<8x32xf32, #tpu.memory_space<vmem>>, vector<1x32xf32>,
    %c2_i32 = arith.constant 2 : i32
    %24 = arith.addi %3, %c2_i32 : i32
    %25 = arith.index_cast %arg0 : i32 to index
    %26 = arith.index_cast %24 : i32 to index
    %27 = memref.load %arg1[%25, %26] : memref<2x8xi32, #tpu.memory_space<smem>>
    %c0_i32_9 = arith.constant 0 : i32
    %28 = arith.maxsi %27, %c0_i32_9 : i32
    %c63_i32_10 = arith.constant 63 : i32
    %29 = arith.minsi %28, %c63_i32_10 : i32
    %30 = arith.index_cast %29 : i32 to index
    %c0_11 = arith.constant 0 : index
    %31 = vector.load %arg2[%30, %c0_11] : memref<64x32xf32, #tpu.memory_space<vmem>>, vector<1x32xf32>
    %32 = arith.index_cast %24 : i32 to index
    %c0_12 = arith.constant 0 : index
    %33 = vector.load %arg7[%32, %c0_12] : memref<8x32xf32, #tpu.memory_space<vmem>>, vector<1x32xf32>
    tpu.vector_store %arg7[%32, %c0_12], %31 {strides = array<i32>} : memref<8x32xf32, #tpu.memory_space<vmem>>, vector<1x32xf32>,
    %c3_i32 = arith.constant 3 : i32
    %34 = arith.addi %3, %c3_i32 : i32
    %35 = arith.index_cast %arg0 : i32 to index
    %36 = arith.index_cast %34 : i32 to index
    %37 = memref.load %arg1[%35, %36] : memref<2x8xi32, #tpu.memory_space<smem>>
    %c0_i32_13 = arith.constant 0 : i32
    %38 = arith.maxsi %37, %c0_i32_13 : i32
    %c63_i32_14 = arith.constant 63 : i32
    %39 = arith.minsi %38, %c63_i32_14 : i32
    %40 = arith.index_cast %39 : i32 to index
    %c0_15 = arith.constant 0 : index
    %41 = vector.load %arg2[%40, %c0_15] : memref<64x32xf32, #tpu.memory_space<vmem>>, vector<1x32xf32>
    %42 = arith.index_cast %34 : i32 to index
    %c0_16 = arith.constant 0 : index
    %43 = vector.load %arg7[%42, %c0_16] : memref<8x32xf32, #tpu.memory_space<vmem>>, vector<1x32xf32>
    tpu.vector_store %arg7[%42, %c0_16], %41 {strides = array<i32>} : memref<8x32xf32, #tpu.memory_space<vmem>>, vector<1x32xf32>,
    %c4_i32 = arith.constant 4 : i32
    %44 = arith.addi %3, %c4_i32 : i32
    %45 = arith.index_cast %arg0 : i32 to index
    %46 = arith.index_cast %44 : i32 to index
    %47 = memref.load %arg1[%45, %46] : memref<2x8xi32, #tpu.memory_space<smem>>
    %c0_i32_17 = arith.constant 0 : i32
    %48 = arith.maxsi %47, %c0_i32_17 : i32
    %c63_i32_18 = arith.constant 63 : i32
    %49 = arith.minsi %48, %c63_i32_18 : i32
    %50 = arith.index_cast %49 : i32 to index
    %c0_19 = arith.constant 0 : index
    %51 = vector.load %arg2[%50, %c0_19] : memref<64x32xf32, #tpu.memory_space<vmem>>, vector<1x32xf32>
    %52 = arith.index_cast %44 : i32 to index
    %c0_20 = arith.constant 0 : index
    %53 = vector.load %arg7[%52, %c0_20] : memref<8x32xf32, #tpu.memory_space<vmem>>, vector<1x32xf32>
    tpu.vector_store %arg7[%52, %c0_20], %51 {strides = array<i32>} : memref<8x32xf32, #tpu.memory_space<vmem>>, vector<1x32xf32>,
    %c5_i32 = arith.constant 5 : i32
    %54 = arith.addi %3, %c5_i32 : i32
    %55 = arith.index_cast %arg0 : i32 to index
    %56 = arith.index_cast %54 : i32 to index
    %57 = memref.load %arg1[%55, %56] : memref<2x8xi32, #tpu.memory_space<smem>>
    %c0_i32_21 = arith.constant 0 : i32
    %58 = arith.maxsi %57, %c0_i32_21 : i32
    %c63_i32_22 = arith.constant 63 : i32
    %59 = arith.minsi %58, %c63_i32_22 : i32
    %60 = arith.index_cast %59 : i32 to index
    %c0_23 = arith.constant 0 : index
    %61 = vector.load %arg2[%60, %c0_23] : memref<64x32xf32, #tpu.memory_space<vmem>>, vector<1x32xf32>
    %62 = arith.index_cast %54 : i32 to index
    %c0_24 = arith.constant 0 : index
    %63 = vector.load %arg7[%62, %c0_24] : memref<8x32xf32, #tpu.memory_space<vmem>>, vector<1x32xf32>
    tpu.vector_store %arg7[%62, %c0_24], %61 {strides = array<i32>} : memref<8x32xf32, #tpu.memory_space<vmem>>, vector<1x32xf32>,
    %c6_i32 = arith.constant 6 : i32
    %64 = arith.addi %3, %c6_i32 : i32
    %65 = arith.index_cast %arg0 : i32 to index
    %66 = arith.index_cast %64 : i32 to index
    %67 = memref.load %arg1[%65, %66] : memref<2x8xi32, #tpu.memory_space<smem>>
    %c0_i32_25 = arith.constant 0 : i32
    %68 = arith.maxsi %67, %c0_i32_25 : i32
    %c63_i32_26 = arith.constant 63 : i32
    %69 = arith.minsi %68, %c63_i32_26 : i32
    %70 = arith.index_cast %69 : i32 to index
    %c0_27 = arith.constant 0 : index
    %71 = vector.load %arg2[%70, %c0_27] : memref<64x32xf32, #tpu.memory_space<vmem>>, vector<1x32xf32>
    %72 = arith.index_cast %64 : i32 to index
    %c0_28 = arith.constant 0 : index
    %73 = vector.load %arg7[%72, %c0_28] : memref<8x32xf32, #tpu.memory_space<vmem>>, vector<1x32xf32>
    tpu.vector_store %arg7[%72, %c0_28], %71 {strides = array<i32>} : memref<8x32xf32, #tpu.memory_space<vmem>>, vector<1x32xf32>,
    %c7_i32 = arith.constant 7 : i32
    %74 = arith.addi %3, %c7_i32 : i32
    %75 = arith.index_cast %arg0 : i32 to index
    %76 = arith.index_cast %74 : i32 to index
    %77 = memref.load %arg1[%75, %76] : memref<2x8xi32, #tpu.memory_space<smem>>
    %c0_i32_29 = arith.constant 0 : i32
    %78 = arith.maxsi %77, %c0_i32_29 : i32
    %c63_i32_30 = arith.constant 63 : i32
    %79 = arith.minsi %78, %c63_i32_30 : i32
    %80 = arith.index_cast %79 : i32 to index
    %c0_31 = arith.constant 0 : index
    %81 = vector.load %arg2[%80, %c0_31] : memref<64x32xf32, #tpu.memory_space<vmem>>, vector<1x32xf32>
    %82 = arith.index_cast %74 : i32 to index
    %c0_32 = arith.constant 0 : index
    %83 = vector.load %arg7[%82, %c0_32] : memref<8x32xf32, #tpu.memory_space<vmem>>, vector<1x32xf32>
    tpu.vector_store %arg7[%82, %c0_32], %81 {strides = array<i32>} : memref<8x32xf32, #tpu.memory_space<vmem>>, vector<1x32xf32>,
    %c1_i32_33 = arith.constant 1 : i32
    %c0_34 = arith.constant 0 : index
    %c0_35 = arith.constant 0 : index
    %84 = vector.load %arg7[%c0_34, %c0_35] : memref<8x32xf32, #tpu.memory_space<vmem>>, vector<8x32xf32>
    %c0_36 = arith.constant 0 : index
    %c0_37 = arith.constant 0 : index
    %85 = vector.load %arg3[%c0_36, %c0_37] : memref<8x32xf32, #tpu.memory_space<vmem>>, vector<8x32xf32>
    %c0_38 = arith.constant 0 : index
    %c0_39 = arith.constant 0 : index
    %86 = vector.load %arg4[%c0_38, %c0_39] : memref<1x32xf32, #tpu.memory_space<vmem>>, vector<1x32xf32>
    %c0_40 = arith.constant 0 : index
    %c0_41 = arith.constant 0 : index
    %87 = vector.load %arg5[%c0_40, %c0_41] : memref<1x32xf32, #tpu.memory_space<vmem>>, vector<1x32xf32>
    %88 = arith.addf %84, %85 : vector<8x32xf32>
    %cst = arith.constant dense<0.000000e+00> : vector<8xf32>
    %89 = vector.multi_reduction <add>, %88, %cst [1] : vector<8x32xf32> to vector<8xf32>
    %90 = vector.shape_cast %89 : vector<8xf32> to vector<8x1xf32>
    %91 = arith.mulf %88, %88 : vector<8x32xf32>
    %cst_42 = arith.constant dense<0.000000e+00> : vector<8xf32>
    %92 = vector.multi_reduction <add>, %91, %cst_42 [1] : vector<8x32xf32> to vector<8xf32>
    %93 = vector.shape_cast %92 : vector<8xf32> to vector<8x1xf32>
    %cst_43 = arith.constant 3.125000e-02 : f32
    %94 = vector.broadcast %cst_43 : f32 to vector<8x1xf32>
    %95 = arith.mulf %90, %94 : vector<8x1xf32>
    %96 = arith.mulf %90, %95 : vector<8x1xf32>
    %97 = arith.subf %93, %96 : vector<8x1xf32>
    %cst_44 = arith.constant 0.0322580636 : f32
    %98 = vector.broadcast %cst_44 : f32 to vector<8x1xf32>
    %99 = arith.mulf %97, %98 : vector<8x1xf32>
    %cst_45 = arith.constant 0.000000e+00 : f32
    %100 = vector.broadcast %cst_45 : f32 to vector<8x1xf32>
    %101 = arith.maximumf %99, %100 : vector<8x1xf32>
    %102 = math.sqrt %101 : vector<8x1xf32>
    %cst_46 = arith.constant 9.99999997E-7 : f32
    %103 = vector.broadcast %cst_46 : f32 to vector<8x1xf32>
    %104 = arith.addf %102, %103 : vector<8x1xf32>
    %105 = tpu.reciprocal %104 {approx = true} : vector<8x1xf32> -> vector<8x1xf32>
    %106 = vector.broadcast %95 : vector<8x1xf32> to vector<8x32xf32>
    %107 = arith.subf %88, %106 : vector<8x32xf32>
    %108 = vector.broadcast %105 : vector<8x1xf32> to vector<8x32xf32>
    %109 = arith.mulf %107, %108 : vector<8x32xf32>
    %110 = vector.broadcast %86 : vector<1x32xf32> to vector<8x32xf32>
    %111 = arith.mulf %110, %109 : vector<8x32xf32>
    %112 = vector.broadcast %87 : vector<1x32xf32> to vector<8x32xf32>
    %113 = arith.addf %111, %112 : vector<8x32xf32>
    %c0_47 = arith.constant 0 : index
    %c0_48 = arith.constant 0 : index
    %c0_49 = arith.constant 0 : index
    %114 = vector.load %arg6[%c0_47, %c0_48, %c0_49] : memref<1x8x32xf32, #tpu.memory_space<vmem>>, vector<1x8x32xf32>
    %115 = vector.shape_cast %114 : vector<1x8x32xf32> to vector<8x32xf32>
    %116 = vector.shape_cast %113 : vector<8x32xf32> to vector<1x8x32xf32>
    tpu.vector_store %arg6[%c0_47, %c0_48, %c0_49], %116 {strides = array<i32>} : memref<1x8x32xf32, #tpu.memory_space<vmem>>, vector<1x8x32xf32>,
    return
  }
  func.func @transform_0(%arg0: i32, %arg1: memref<2x8xi32, #tpu.memory_space<smem>>) -> (i32, i32) {
    %c0_i32 = arith.constant 0 : i32
    %c0_i32_0 = arith.constant 0 : i32
    %c0_i32_1 = arith.constant 0 : i32
    return %c0_i32, %c0_i32_0 : i32, i32
  }
  func.func @transform_1(%arg0: i32, %arg1: memref<2x8xi32, #tpu.memory_space<smem>>) -> (i32, i32) {
    %c0_i32 = arith.constant 0 : i32
    %c0_i32_0 = arith.constant 0 : i32
    %c0_i32_1 = arith.constant 0 : i32
    return %c0_i32, %c0_i32_0 : i32, i32
  }
  func.func @transform_2(%arg0: i32, %arg1: memref<2x8xi32, #tpu.memory_space<smem>>) -> (i32, i32) {
    %c0_i32 = arith.constant 0 : i32
    %c0_i32_0 = arith.constant 0 : i32
    %c0_i32_1 = arith.constant 0 : i32
    return %c0_i32, %c0_i32_0 : i32, i32
  }
  func.func @transform_3(%arg0: i32, %arg1: memref<2x8xi32, #tpu.memory_space<smem>>) -> (i32, i32) {
    %c0_i32 = arith.constant 0 : i32
    %c0_i32_0 = arith.constant 0 : i32
    %c0_i32_1 = arith.constant 0 : i32
    return %c0_i32, %c0_i32_0 : i32, i32
  }
  func.func @transform_4(%arg0: i32, %arg1: memref<2x8xi32, #tpu.memory_space<smem>>) -> (i32, i32, i32) {
    %c0_i32 = arith.constant 0 : i32
    %c0_i32_0 = arith.constant 0 : i32
    %c0_i32_1 = arith.constant 0 : i32
    return %arg0, %c0_i32, %c0_i32_0 : i32, i32, i32
  }
}

</mosaic_0001>

<llo_original>
// kernel: _lambda_.1
$region0: #{_lambda_.1}
  #allocation0 [shape = 'u32[]', space=smem, size = 0x4, offset = 0x4, fixed_abs, tag = 'smem constant byte address 0x4 - core index']
  #allocation1 [shape = 'u32[72,128]{1,0:T(1,128)}', space=vmem, size = 0x9000, scoped, tag = 'internal scratch']
  #allocation2 [shape = 'f32[8,32]{1,0:T(8,128)}', space=vmem, size = 0x1000, scoped, tag = 'scratch operand']
  #allocation3 [shape = 's32[1]{0}', space=sflag, size = 0x4, scoped, tag = 'scoped memory for _lambda_.1']
  #allocation4 [shape = 'u8[1024]{0}', space=smem, size = 0x400, scoped, tag = 'prefetched SMEM operand 0']
  %s0 = inlined_call_operand.vmem [shape: s32[2,8], index: 0, kind: input, shape index: {}]
  %s1 = inlined_call_operand.vmem [shape: f32[64,32], index: 1, kind: input, shape index: {}]
  %s2 = inlined_call_operand.vmem [shape: f32[8,32], index: 2, kind: input, shape index: {}]
  %s3 = inlined_call_operand.vmem [shape: f32[1,32], index: 3, kind: input, shape index: {}]
  %s4 = inlined_call_operand.vmem [shape: f32[1,32], index: 4, kind: input, shape index: {}]
  %s5 = inlined_call_operand.hbm [shape: f32[2,8,32], index: 5, kind: output, shape index: {}]
  %s6 = sld [smem:[#allocation0]]
  $region49: #{_lambda_.1} parent=0
    _
  %s8 = ssub.s32 1, %s6
  %s9 = scalar_select 0, %s8, %s6
  %s11 = sshll.u32 %s0, 4
  %s12 = int_to_ptr.vmem [resolvable:$true] %s11
  %14 = dma.vmem_to_smem %s12, 32, [#allocation4], [#allocation3]
  %16 = dma.done [#allocation3], 32
  %17 = sfence
  $region1: #{_lambda_.1} parent=0
    #allocation5 [shape = 'u8[8192]{0}', space=vmem, size = 0x2000, scoped, tag = 'output window, operand 0']
    #allocation6 [shape = 's32[2]{0}', space=sflag, size = 0x8, scoped, tag = 'scoped memory for _lambda_.1']
    %18 = vsyncpa [#allocation6], 0
    %s19 = scalar_lea.sflag [#allocation6], 1
    %20 = vsyncpa %s19, 0
    loop: start=0, step=1, limit=4
    $region2: #{_lambda_.1} parent=1 // loop_pre_header
      _
    $region3: #{_lambda_.1} parent=1 // loop_header
      %s22 = sphi 0, %s26
      %p23 = scmp.ge.s32.totalorder %s22, 4
      %s30 = sphi 0, %s30
      %s32 = sphi 0, %s30
      %s33 = sphi 0, %s32
      %s47 = sphi 0, %s33
      %s51 = sphi 0, %s51
      %s53 = sphi 0, %s51
      %s54 = sphi 0, %s53
      %s68 = sphi 0, %s54
      %s72 = sphi 0, %s72
      %s74 = sphi 0, %s72
      %s75 = sphi 0, %s74
      %s89 = sphi 0, %s75
      %s93 = sphi 0, %s93
      %s95 = sphi 0, %s93
      %s96 = sphi 0, %s95
      %s110 = sphi 0, %s96
      %s116 = sphi 0, %s118
      %s119 = sphi 0, %s116
      %s120 = sphi 0, %s119
      %s136 = sphi 0, %s120
    $region4: #{_lambda_.1} parent=1 // loop_header_branch
      %25 = sbr.rel (%p23) target = $region8
    $region5: #{_lambda_.1} parent=1 // loop_body
      %s27 = ssub.s32 %s22, 1
      %s28 = ssub.s32 %s22, 2
      %s29 = sadd.s32 %s22, 1
      %s31 = sadd.s32 %s30, 1
      %p34 = scmp.eq.s32.totalorder %s22, 1
      %p35 = scmp.ne.s32.totalorder %s30, %s32
      %p36 = scmp.eq.s32.totalorder %s22, 0
      %p37 = por %p35, %p36
      %p38 = scmp.ne.s32.totalorder %s30, %s32
      %p39 = scmp.eq.s32.totalorder %s27, 1
      %p40 = por %p38, %p39
      %p41 = scmp.ne.s32.totalorder %s32, %s33
      %p42 = scmp.eq.s32.totalorder %s27, 0
      %p43 = por %p41, %p42
      %p44 = scmp.ne.s32.totalorder %s32, %s33
      %p45 = scmp.eq.s32.totalorder %s28, 1
      %p46 = por %p44, %p45
      %p48 = scmp.ne.s32.totalorder %s33, %s47
      %p49 = scmp.eq.s32.totalorder %s28, 0
      %p50 = por %p48, %p49
      %s52 = sadd.s32 %s51, 1
      %p55 = scmp.eq.s32.totalorder %s22, 1
      %p56 = scmp.ne.s32.totalorder %s51, %s53
      %p57 = scmp.eq.s32.totalorder %s22, 0
      %p58 = por %p56, %p57
      %p59 = scmp.ne.s32.totalorder %s51, %s53
      %p60 = scmp.eq.s32.totalorder %s27, 1
      %p61 = por %p59, %p60
      %p62 = scmp.ne.s32.totalorder %s53, %s54
      %p63 = scmp.eq.s32.totalorder %s27, 0
      %p64 = por %p62, %p63
      %p65 = scmp.ne.s32.totalorder %s53, %s54
      %p66 = scmp.eq.s32.totalorder %s28, 1
      %p67 = por %p65, %p66
      %p69 = scmp.ne.s32.totalorder %s54, %s68
      %p70 = scmp.eq.s32.totalorder %s28, 0
      %p71 = por %p69, %p70
      %s73 = sadd.s32 %s72, 1
      %p76 = scmp.eq.s32.totalorder %s22, 1
      %p77 = scmp.ne.s32.totalorder %s72, %s74
      %p78 = scmp.eq.s32.totalorder %s22, 0
      %p79 = por %p77, %p78
      %p80 = scmp.ne.s32.totalorder %s72, %s74
      %p81 = scmp.eq.s32.totalorder %s27, 1
      %p82 = por %p80, %p81
      %p83 = scmp.ne.s32.totalorder %s74, %s75
      %p84 = scmp.eq.s32.totalorder %s27, 0
      %p85 = por %p83, %p84
      %p86 = scmp.ne.s32.totalorder %s74, %s75
      %p87 = scmp.eq.s32.totalorder %s28, 1
      %p88 = por %p86, %p87
      %p90 = scmp.ne.s32.totalorder %s75, %s89
      %p91 = scmp.eq.s32.totalorder %s28, 0
      %p92 = por %p90, %p91
      %s94 = sadd.s32 %s93, 1
      %p97 = scmp.eq.s32.totalorder %s22, 1
      %p98 = scmp.ne.s32.totalorder %s93, %s95
      %p99 = scmp.eq.s32.totalorder %s22, 0
      %p100 = por %p98, %p99
      %p101 = scmp.ne.s32.totalorder %s93, %s95
      %p102 = scmp.eq.s32.totalorder %s27, 1
      %p103 = por %p101, %p102
      %p104 = scmp.ne.s32.totalorder %s95, %s96
      %p105 = scmp.eq.s32.totalorder %s27, 0
      %p106 = por %p104, %p105
      %p107 = scmp.ne.s32.totalorder %s95, %s96
      %p108 = scmp.eq.s32.totalorder %s28, 1
      %p109 = por %p107, %p108
      %p111 = scmp.ne.s32.totalorder %s96, %s110
      %p112 = scmp.eq.s32.totalorder %s28, 0
      %p113 = por %p111, %p112
      %s114 = ssub.s32 %s22, %s29
      %p115 = scmp.eq.s32.totalorder %s114, 0
      %s117 = sadd.s32 %s116, 1
      %s118 = scalar_select %p115, %s116, %s117
      %p121 = pneg %p115
      %p122 = scmp.eq.s32.totalorder %s22, 1
      %p123 = por %p121, %p122
      %p124 = scmp.ne.s32.totalorder %s116, %s119
      %p125 = scmp.eq.s32.totalorder %s22, 0
      %p126 = por %p124, %p125
      %p127 = scmp.ne.s32.totalorder %s116, %s119
      %p128 = scmp.eq.s32.totalorder %s27, 1
      %p129 = por %p127, %p128
      %p130 = scmp.ne.s32.totalorder %s119, %s120
      %p131 = scmp.eq.s32.totalorder %s27, 0
      %p132 = por %p130, %p131
      %p133 = scmp.ne.s32.totalorder %s119, %s120
      %p134 = scmp.eq.s32.totalorder %s28, 1
      %p135 = por %p133, %p134
      %p137 = scmp.ne.s32.totalorder %s120, %s136
      %p138 = scmp.eq.s32.totalorder %s28, 0
      %p139 = por %p137, %p138
      %p140 = scmp.le.s32.totalorder 1, %s22
      %p141 = scmp.lt.s32.totalorder %s22, 3
      %p142 = pnand %p140, %p141
      %p143 = pneg %p142
      // Predicated region
      $region9: #{_lambda_.1} parent=5 // pred_check
        _
      $region10: #{_lambda_.1} parent=5 // pred_check_branch
        %145 = sbr.rel (%p142) target = $region12
      $region11: #{_lambda_.1} parent=5 // pred_region
        %s146 = ssub.s32 %s22, 1
        // Predicated region
        $region13: #{_lambda_.1} parent=11 // pred_check
          %p147 = pneg %p43
        $region14: #{_lambda_.1} parent=11 // pred_check_branch
          %149 = sbr.rel (%p147) target = $region16
        $region15: #{_lambda_.1} parent=11 // pred_region
          _
        $region16: #{_lambda_.1} parent=11 // pred_fallthru
          _
        // Predicated region
        $region17: #{_lambda_.1} parent=11 // pred_check
          %p150 = pneg %p64
        $region18: #{_lambda_.1} parent=11 // pred_check_branch
          %152 = sbr.rel (%p150) target = $region20
        $region19: #{_lambda_.1} parent=11 // pred_region
          _
        $region20: #{_lambda_.1} parent=11 // pred_fallthru
          _
        // Predicated region
        $region21: #{_lambda_.1} parent=11 // pred_check
          %p153 = pneg %p85
        $region22: #{_lambda_.1} parent=11 // pred_check_branch
          %155 = sbr.rel (%p153) target = $region24
        $region23: #{_lambda_.1} parent=11 // pred_region
          _
        $region24: #{_lambda_.1} parent=11 // pred_fallthru
          _
        // Predicated region
        $region25: #{_lambda_.1} parent=11 // pred_check
          %p156 = pneg %p106
        $region26: #{_lambda_.1} parent=11 // pred_check_branch
          %158 = sbr.rel (%p156) target = $region28
        $region27: #{_lambda_.1} parent=11 // pred_region
          _
        $region28: #{_lambda_.1} parent=11 // pred_fallthru
          _
      $region12: #{_lambda_.1} parent=5 // pred_fallthru
        _
      %p159 = scmp.lt.s32.totalorder %s22, 2
      // Predicated region
      $region29: #{_lambda_.1} parent=5 // pred_check
        %p160 = pneg %p159
      $region30: #{_lambda_.1} parent=5 // pred_check_branch
        %162 = sbr.rel (%p160) target = $region32
      $region31: #{_lambda_.1} parent=5 // pred_region
        _
      $region32: #{_lambda_.1} parent=5 // pred_fallthru
        _
      %p163 = scmp.le.s32.totalorder 1, %s22
      %p164 = scmp.lt.s32.totalorder %s22, 3
      %p165 = pnand %p163, %p164
      %p166 = pneg %p165
      // Predicated region
      $region33: #{_lambda_.1} parent=5 // pred_check
        _
      $region34: #{_lambda_.1} parent=5 // pred_check_branch
        %168 = sbr.rel (%p165) target = $region36
      $region35: #{_lambda_.1} parent=5 // pred_region
        %s169 = ssub.s32 %s22, 1
        %p170 = pneg %p43
        %p171 = pneg %p40
        %p172 = pneg %p64
        %p173 = pneg %p61
        %p174 = pneg %p85
        %p175 = pneg %p82
        %p176 = pneg %p106
        %p177 = pneg %p103
        %p178 = pneg %p132
        %p179 = pneg %p129
        %s180 = sand.u32 %s119, 1
        %s181 = scalar_lea.sflag [#allocation6], %s180
        %s182 = sand.u32 %s119, 1
        %s183 = smul.addr %s182, 8
        %s184 = scalar_lea.vmem [#allocation5], %s183
        %s185 = sadd.s32 0, %s27
        %s186 = smul.u32 %s185, 128
        %s187 = sadd.s32 %s186, 0
        %s188 = sld [smem:[#allocation4 + %s187]]
        %p189 = scmp.gt.s32.totalorder %s188, 0
        %s190 = scalar_select %p189, %s188, 0
        %p191 = scmp.lt.s32.totalorder %s190, 63
        %s192 = scalar_select %p191, %s190, 63
        %s193 = scalar_lea.vmem %s1, %s192
        %v194 = vld [vmem:[%s193] sm:$0x1]
        %vm195 = vcmask 253952
        %196 = vst.msk [vmem:[#allocation2] sm:$0x1] %vm195, %v194
        %s197 = sadd.s32 0, 1
        %s198 = sshra.s32 %s197, 7
        %s199 = sand.u32 %s197, 127
        %s200 = sadd.s32 %s198, %s27
        %s201 = smul.u32 %s200, 128
        %s202 = sshra.s32 %s197, 7
        %s203 = sand.u32 %s197, 127
        %s204 = sadd.s32 %s201, %s203
        %s205 = sld [smem:[#allocation4 + %s204]]
        %p206 = scmp.gt.s32.totalorder %s205, 0
        %s207 = scalar_select %p206, %s205, 0
        %p208 = scmp.lt.s32.totalorder %s207, 63
        %s209 = scalar_select %p208, %s207, 63
        %s210 = scalar_lea.vmem %s1, %s209
        %v211 = vld [vmem:[%s210] sm:$0x1]
        %s212 = scalar_lea.vmem [#allocation2], %s197
        %213 = vst.msk [vmem:[%s212] sm:$0x1] %vm195, %v211
        %s214 = sadd.s32 0, 2
        %s215 = sshra.s32 %s214, 7
        %s216 = sand.u32 %s214, 127
        %s217 = sadd.s32 %s215, %s27
        %s218 = smul.u32 %s217, 128
        %s219 = sshra.s32 %s214, 7
        %s220 = sand.u32 %s214, 127
        %s221 = sadd.s32 %s218, %s220
        %s222 = sld [smem:[#allocation4 + %s221]]
        %p223 = scmp.gt.s32.totalorder %s222, 0
        %s224 = scalar_select %p223, %s222, 0
        %p225 = scmp.lt.s32.totalorder %s224, 63
        %s226 = scalar_select %p225, %s224, 63
        %s227 = scalar_lea.vmem %s1, %s226
        %v228 = vld [vmem:[%s227] sm:$0x1]
        %s229 = scalar_lea.vmem [#allocation2], %s214
        %230 = vst.msk [vmem:[%s229] sm:$0x1] %vm195, %v228
        %s231 = sadd.s32 0, 3
        %s232 = sshra.s32 %s231, 7
        %s233 = sand.u32 %s231, 127
        %s234 = sadd.s32 %s232, %s27
        %s235 = smul.u32 %s234, 128
        %s236 = sshra.s32 %s231, 7
        %s237 = sand.u32 %s231, 127
        %s238 = sadd.s32 %s235, %s237
        %s239 = sld [smem:[#allocation4 + %s238]]
        %p240 = scmp.gt.s32.totalorder %s239, 0
        %s241 = scalar_select %p240, %s239, 0
        %p242 = scmp.lt.s32.totalorder %s241, 63
        %s243 = scalar_select %p242, %s241, 63
        %s244 = scalar_lea.vmem %s1, %s243
        %v245 = vld [vmem:[%s244] sm:$0x1]
        %s246 = scalar_lea.vmem [#allocation2], %s231
        %247 = vst.msk [vmem:[%s246] sm:$0x1] %vm195, %v245
        %s248 = sadd.s32 0, 4
        %s249 = sshra.s32 %s248, 7
        %s250 = sand.u32 %s248, 127
        %s251 = sadd.s32 %s249, %s27
        %s252 = smul.u32 %s251, 128
        %s253 = sshra.s32 %s248, 7
        %s254 = sand.u32 %s248, 127
        %s255 = sadd.s32 %s252, %s254
        %s256 = sld [smem:[#allocation4 + %s255]]
        %p257 = scmp.gt.s32.totalorder %s256, 0
        %s258 = scalar_select %p257, %s256, 0
        %p259 = scmp.lt.s32.totalorder %s258, 63
        %s260 = scalar_select %p259, %s258, 63
        %s261 = scalar_lea.vmem %s1, %s260
        %v262 = vld [vmem:[%s261] sm:$0x1]
        %s263 = scalar_lea.vmem [#allocation2], %s248
        %264 = vst.msk [vmem:[%s263] sm:$0x1] %vm195, %v262
        %s265 = sadd.s32 0, 5
        %s266 = sshra.s32 %s265, 7
        %s267 = sand.u32 %s265, 127
        %s268 = sadd.s32 %s266, %s27
        %s269 = smul.u32 %s268, 128
        %s270 = sshra.s32 %s265, 7
        %s271 = sand.u32 %s265, 127
        %s272 = sadd.s32 %s269, %s271
        %s273 = sld [smem:[#allocation4 + %s272]]
        %p274 = scmp.gt.s32.totalorder %s273, 0
        %s275 = scalar_select %p274, %s273, 0
        %p276 = scmp.lt.s32.totalorder %s275, 63
        %s277 = scalar_select %p276, %s275, 63
        %s278 = scalar_lea.vmem %s1, %s277
        %v279 = vld [vmem:[%s278] sm:$0x1]
        %s280 = scalar_lea.vmem [#allocation2], %s265
        %281 = vst.msk [vmem:[%s280] sm:$0x1] %vm195, %v279
        %s282 = sadd.s32 0, 6
        %s283 = sshra.s32 %s282, 7
        %s284 = sand.u32 %s282, 127
        %s285 = sadd.s32 %s283, %s27
        %s286 = smul.u32 %s285, 128
        %s287 = sshra.s32 %s282, 7
        %s288 = sand.u32 %s282, 127
        %s289 = sadd.s32 %s286, %s288
        %s290 = sld [smem:[#allocation4 + %s289]]
        %p291 = scmp.gt.s32.totalorder %s290, 0
        %s292 = scalar_select %p291, %s290, 0
        %p293 = scmp.lt.s32.totalorder %s292, 63
        %s294 = scalar_select %p293, %s292, 63
        %s295 = scalar_lea.vmem %s1, %s294
        %v296 = vld [vmem:[%s295] sm:$0x1]
        %s297 = scalar_lea.vmem [#allocation2], %s282
        %298 = vst.msk [vmem:[%s297] sm:$0x1] %vm195, %v296
        %s299 = sadd.s32 0, 7
        %s300 = sshra.s32 %s299, 7
        %s301 = sand.u32 %s299, 127
        %s302 = sadd.s32 %s300, %s27
        %s303 = smul.u32 %s302, 128
        %s304 = sshra.s32 %s299, 7
        %s305 = sand.u32 %s299, 127
        %s306 = sadd.s32 %s303, %s305
        %s307 = sld [smem:[#allocation4 + %s306]]
        %p308 = scmp.gt.s32.totalorder %s307, 0
        %s309 = scalar_select %p308, %s307, 0
        %p310 = scmp.lt.s32.totalorder %s309, 63
        %s311 = scalar_select %p310, %s309, 63
        %s312 = scalar_lea.vmem %s1, %s311
        %v313 = vld [vmem:[%s312] sm:$0x1]
        %s314 = scalar_lea.vmem [#allocation2], %s299
        %315 = vst.msk [vmem:[%s314] sm:$0x1] %vm195, %v313
        %v316 = vld [vmem:[#allocation2] sm:$0xff]
        %v317 = vld [vmem:[%s2] sm:$0xff]
        %v318 = vld [vmem:[%s3] sm:$0x1]
        %v319 = vld [vmem:[%s4] sm:$0x1]
        %v320 = vadd.f32 %v316, %v317
        %vm321 = vcmask 261120
        %v322 = vsel %vm321, %v320, 0.0
        %323 = vadd.xlane.f32.xlu0 %v322
        %v324 = vpop.xlane.xlu0 %323
        %v325 = vmul.f32 %v320, %v320
        %v326 = vsel %vm321, %v325, 0.0
        %327 = vadd.xlane.f32.xlu0 %v326
        %v328 = vpop.xlane.xlu0 %327
        %v329 = vmul.f32 %v324, 0.03125
        %v330 = vmul.f32 %v324, %v329
        %v331 = vsub.f32 %v328, %v330
        %v332 = vmul.f32 %v331, 0.032258064
        %v333 = vmax.f32 %v332, 0.0
        %v334 = vrsqrt.pop %v333
        %v335 = vmul.f32 %v334, %v333
        %v336 = vmul.f32 %v335, %v334
        %v337 = vmul.f32 0.5, %v336
        %v338 = vsub.f32 1.5, %v337
        %v339 = vmul.f32 %v334, %v338
        %v340 = vmul.f32 %v333, %v339
        %vm341 = vcmp.eq.f32.partialorder %v333, inf
        %v342 = vsel %vm341, %v333, %v340
        %vm343 = vcmp.eq.f32.partialorder %v333, 0.0
        %v344 = vand.u32 %v333, 2147483648
        %v345 = vsel %vm343, %v344, %v342
        %v346 = vadd.f32 %v345, 1e-06
        %v347 = vrcp.pop %v346
        %v348 = vsub.f32 %v320, %v329
        %v349 = vmul.f32 %v348, %v347
        %v351 = vperm.slane %v318, 0
        %v353 = vmul.f32 %v351, %v349
        %v355 = vperm.slane %v319, 0
        %v357 = vadd.f32 %v353, %v355
        %358 = vst.msk [vmem:[%s184] sm:$0xff] %vm321, %v357
        %s359 = sand.u32 %s119, 1
        %s360 = scalar_lea.sflag [#allocation6], %s359
        %s361 = sand.u32 %s119, 1
        %s362 = smul.addr %s361, 8
        %s363 = scalar_lea.vmem [#allocation5], %s362
        // Predicated region
        $region37: #{_lambda_.1} parent=35 // pred_check
          %p364 = pneg %p129
        $region38: #{_lambda_.1} parent=35 // pred_check_branch
          %366 = sbr.rel (%p364) target = $region40
        $region39: #{_lambda_.1} parent=35 // pred_region
          %368 = vsyncadd %s360, 0
          %s369 = smul.addr %s27, 8
          %s370 = scalar_lea.hbm %s5, %s369
          %s372 = sshll.u32 %s363, 4
          %s373 = int_to_ptr.vmem [resolvable:$true] %s372
          %s374 = sshll.u32 %s370, 4
          %s375 = int_to_ptr.hbm [resolvable:$true] %s374
          %377 = dma.vmem_to_hbm [thread:$0]  %s373, 128, %s375, %s360
        $region40: #{_lambda_.1} parent=35 // pred_fallthru
          _
      $region36: #{_lambda_.1} parent=5 // pred_fallthru
        _
      %p378 = scmp.le.s32.totalorder 2, %s22
      // Predicated region
      $region41: #{_lambda_.1} parent=5 // pred_check
        %p379 = pneg %p378
      $region42: #{_lambda_.1} parent=5 // pred_check_branch
        %381 = sbr.rel (%p379) target = $region44
      $region43: #{_lambda_.1} parent=5 // pred_region
        %s382 = ssub.s32 %s22, 2
        // Predicated region
        $region45: #{_lambda_.1} parent=43 // pred_check
          %p383 = pneg %p135
        $region46: #{_lambda_.1} parent=43 // pred_check_branch
          %385 = sbr.rel (%p383) target = $region48
        $region47: #{_lambda_.1} parent=43 // pred_region
          %s386 = sand.u32 %s120, 1
          %s387 = scalar_lea.sflag [#allocation6], %s386
          %s388 = sand.u32 %s120, 1
          %s389 = smul.addr %s388, 8
          %s390 = scalar_lea.vmem [#allocation5], %s389
          %392 = dma.done %s387, 128
        $region48: #{_lambda_.1} parent=43 // pred_fallthru
          _
      $region44: #{_lambda_.1} parent=5 // pred_fallthru
        _
    $region6: #{_lambda_.1} parent=1 // loop_footer
      %s26 = sadd.s32 1, %s22
    $region7: #{_lambda_.1} parent=1 // loop_footer_branch
      %21 = sbr.rel target = $region3
    $region8: #{_lambda_.1} parent=1 // loop_exit
      _
    %393 = vsyncpa [#allocation6], 1
    %s394 = scalar_lea.sflag [#allocation6], 1
    %395 = vsyncpa %s394, 1

</llo_original>
